<compile_context>
chip_gen: v6e
topology: v6e:2x2x1
jax: 0.10.0
libtpu: 0.0.40
codegen_flags: <defaults>
</compile_context>

<pallas_src>
import functools

import jax
import jax.numpy as jnp
from jax.experimental import pallas as pl
from jax.experimental.pallas import tpu as pltpu


def _rmsnorm_kernel(x_ref, w_ref, o_ref, *, eps: float, inv_dim: float,
                    exact_type_as: bool):
    # x_ref: (tile_rows, dim), w_ref: (1, dim) f32, o_ref: (tile_rows, dim)
    x32 = x_ref[...].astype(jnp.float32)                        # x.float()
    # cross-lane reduce lands on XLU, rsqrt on EUP: both off the VPU/DMA path
    ms = jnp.sum(x32 * x32, axis=-1, keepdims=True) * inv_dim   # pow(2).mean(-1)
    inv = jax.lax.rsqrt(ms + eps)                               # rsqrt on EUP
    if exact_type_as:
        # bit-exact PyTorch `.type_as(x)` quantization before the weight mult
        normed = (x32 * inv).astype(x_ref.dtype).astype(jnp.float32)
    else:
        normed = x32 * inv
    o_ref[...] = (w_ref[...] * normed).astype(o_ref.dtype)


def _round_up(n: int, m: int) -> int:
    return ((n + m - 1) // m) * m


def _tpu_info() -> tuple[int, int]:
    """Returns (per-TensorCore VMEM bytes, TensorCores per chip)."""
    vmem = 64 << 20   # conservative fallback (v7x per-TC VMEM)
    num_tc = 1
    try:
        info = pltpu.get_tpu_info()
        vmem = int(info.vmem_capacity_bytes)
        for attr in ("num_tensorcores", "tensorcores_per_chip",
                     "num_cores", "core_count"):
            v = getattr(info, attr, None)
            if v:
                num_tc = int(v)
                break
        else:
            # Heuristic: 64 MiB per-TC VMEM => v7x-class chip with 2 TCs.
            num_tc = 2 if vmem <= (64 << 20) else 1
    except Exception:
        pass
    return vmem, num_tc


def _pick_tile_rows(rows: int, dim: int, in_itemsize: int, out_itemsize: int,
                    vmem_bytes: int, num_tc: int) -> int:
    # Budget covers: double-buffered input + output tiles AND ~2 f32 full-tile
    # intermediates (x32, weight*normed) produced inside the kernel.
    budget = int(vmem_bytes * 0.40)
    per_row = dim * (2 * in_itemsize + 2 * out_itemsize + 2 * 4)
    tile = budget // max(per_row, 1)
    # Larger hard cap only on 128 MiB-VMEM parts (v5e/v6e); keep 1024 on v7x.
    hard_cap = 2048 if vmem_bytes >= (96 << 20) else 1024
    rows_up = _round_up(rows, 8)
    tile = min(tile, hard_cap, rows_up)
    tile = max(8, (tile // 8) * 8)

    if num_tc > 1:
        if rows_up > tile:
            # Round the grid-step count up to a multiple of num_tc so the
            # parallel axis shards evenly across TensorCores.
            steps = _round_up(pl.cdiv(rows, tile), num_tc)
            tile = max(8, _round_up(pl.cdiv(rows, steps), 8))
        elif rows > 8:
            # Small problem: split across the TCs instead of one lone tile.
            tile = max(8, _round_up(pl.cdiv(rows, num_tc), 8))
    return int(tile)


def rmsnorm(x: jax.Array, weight: jax.Array, eps: float = 1e-6,
            tile_rows: int | None = None,
            out_dtype: jnp.dtype | None = None,
            match_torch_promotion: bool = False,
            exact_type_as: bool = False) -> jax.Array:
    """RMSNorm over the last axis of x, arbitrary leading dims.

    Default is the bandwidth-lean path: output dtype == x.dtype and no
    intermediate re-quantization.  Set match_torch_promotion=True (and
    exact_type_as=True) to bit-match `weight * self._norm(x.float()).type_as(x)`
    with a float32 weight for sub-f32 inputs.
    """
    orig_shape = x.shape
    dim = orig_shape[-1]
    x2d = x.reshape(-1, dim)
    rows = x2d.shape[0]

    w2d = weight.reshape(1, dim).astype(jnp.float32)

    if out_dtype is None:
        out_dtype = (jnp.result_type(x.dtype, jnp.float32)
                     if match_torch_promotion else x.dtype)

    in_itemsize = jnp.dtype(x.dtype).itemsize
    out_itemsize = jnp.dtype(out_dtype).itemsize

    vmem_cap, num_tc = _tpu_info()
    if tile_rows is None:
        tile_rows = _pick_tile_rows(rows, dim, in_itemsize, out_itemsize,
                                    vmem_cap, num_tc)

    # No full-tensor pad copy: non-divisible grids use a masked partial last
    # block.  RMSNorm is row-independent, so garbage in padded rows of the
    # last input tile never contaminates valid output rows.
    grid = (pl.cdiv(rows, tile_rows),)

    footprint = (2 * tile_rows * dim * in_itemsize      # double-buffered input
                 + 2 * tile_rows * dim * out_itemsize   # double-buffered output
                 + 2 * tile_rows * dim * 4              # f32 intermediates
                 + 2 * dim * 4)                         # weight row
    vmem_limit = int(min(int(vmem_cap * 0.9),
                         max(32 << 20, int(footprint * 1.25))))
    vmem_limit = max(vmem_limit, footprint)

    cost = pl.CostEstimate(
        flops=5 * rows * dim,
        transcendentals=rows,
        bytes_accessed=rows * dim * (in_itemsize + out_itemsize) + dim * 4,
    )

    out = pl.pallas_call(
        functools.partial(_rmsnorm_kernel, eps=eps, inv_dim=1.0 / dim,
                          exact_type_as=exact_type_as),
        out_shape=jax.ShapeDtypeStruct((rows, dim), out_dtype),
        grid_spec=pltpu.PrefetchScalarGridSpec(
            num_scalar_prefetch=0,
            grid=grid,
            in_specs=[
                pl.BlockSpec((tile_rows, dim), lambda i: (i, 0)),
                pl.BlockSpec((1, dim), lambda i: (0, 0)),
            ],
            out_specs=pl.BlockSpec((tile_rows, dim), lambda i: (i, 0)),
        ),
        compiler_params=pltpu.CompilerParams(
            dimension_semantics=("parallel",),
            vmem_limit_bytes=vmem_limit,
        ),
        cost_estimate=cost,
    )(x2d, w2d)

    return out.reshape(orig_shape[:-1] + (dim,))


def _ref_rmsnorm(x, weight, eps=1e-6, out_dtype=None):
    x32 = x.astype(jnp.float32)
    inv = jax.lax.rsqrt(jnp.mean(x32 * x32, axis=-1, keepdims=True) + eps)
    y = weight.astype(jnp.float32) * (x32 * inv)
    return y.astype(out_dtype if out_dtype is not None else x.dtype)


if __name__ == "__main__":
    key = jax.random.PRNGKey(0)
    batch, seq, hidden = 2, 8, 32

    # --- test 1: f32 input, ones weight (matches the nn.Module init) -------
    x = jax.random.normal(key, (batch, seq, hidden), dtype=jnp.float32)
    weight = jnp.ones((hidden,), dtype=jnp.float32)

    out = jax.block_until_ready(rmsnorm(x, weight, eps=1e-6))
    ref = _ref_rmsnorm(x, weight)
    assert out.shape == ref.shape and out.dtype == ref.dtype
    assert jnp.allclose(out, ref, atol=1e-5, rtol=1e-5)

    # --- test 2: partial last block (rows % tile_rows != 0), random weight -
    k1, k2 = jax.random.split(key)
    x2 = jax.random.normal(k1, (5, 4, hidden), dtype=jnp.float32)   # 20 rows
    w2 = jax.random.normal(k2, (hidden,), dtype=jnp.float32)
    out2 = jax.block_until_ready(rmsnorm(x2, w2, eps=1e-6, tile_rows=16))
    ref2 = _ref_rmsnorm(x2, w2)
    assert out2.shape == ref2.shape and out2.dtype == ref2.dtype
    assert jnp.allclose(out2, ref2, atol=1e-5, rtol=1e-5)

    # --- test 3: bf16 input, bandwidth-lean default (out_dtype == bf16) ----
    x3 = jax.random.normal(key, (batch, seq, hidden)).astype(jnp.bfloat16)
    out3 = jax.block_until_ready(rmsnorm(x3, weight, eps=1e-6))
    ref3 = _ref_rmsnorm(x3, weight, out_dtype=jnp.bfloat16)
    assert out3.shape == ref3.shape and out3.dtype == jnp.bfloat16
    assert jnp.allclose(out3.astype(jnp.float32), ref3.astype(jnp.float32),
                        atol=2e-2, rtol=2e-2)

    print("KERNEL_OK")
</pallas_src>

<mosaic_0001>
module attributes {stable_mosaic.version = 11 : i64} {
  func.func @_rmsnorm_kernel(%arg0: i32, %arg1: memref<16x32xf32, #tpu.memory_space<vmem>>, %arg2: memref<1x32xf32, #tpu.memory_space<vmem>>, %arg3: memref<16x32xf32, #tpu.memory_space<vmem>>) attributes {dimension_semantics = [#tpu.dimension_semantics<parallel>], iteration_bounds = array<i64: 1>, scalar_prefetch = 0 : i64, scratch_operands = 0 : i64, tpu.core_type = #tpu.core_type<tc>, window_params = [{transform_indices = @transform_0, window_bounds = array<i64: 16, 32>}, {pipeline_mode = #tpu.pipeline_mode<synchronous>, transform_indices = @transform_1, window_bounds = array<i64: 1, 32>}, {transform_indices = @transform_2, window_bounds = array<i64: 16, 32>}]} {
    %c0 = arith.constant 0 : index
    %c0_0 = arith.constant 0 : index
    %0 = vector.load %arg1[%c0, %c0_0] : memref<16x32xf32, #tpu.memory_space<vmem>>, vector<16x32xf32>
    %1 = arith.mulf %0, %0 : vector<16x32xf32>
    %cst = arith.constant dense<0.000000e+00> : vector<16xf32>
    %2 = vector.multi_reduction <add>, %1, %cst [1] : vector<16x32xf32> to vector<16xf32>
    %3 = vector.shape_cast %2 : vector<16xf32> to vector<16x1xf32>
    %cst_1 = arith.constant 3.125000e-02 : f32
    %4 = vector.broadcast %cst_1 : f32 to vector<16x1xf32>
    %5 = arith.mulf %3, %4 : vector<16x1xf32>
    %cst_2 = arith.constant 9.99999997E-7 : f32
    %6 = vector.broadcast %cst_2 : f32 to vector<16x1xf32>
    %7 = arith.addf %5, %6 : vector<16x1xf32>
    %8 = math.rsqrt %7 : vector<16x1xf32>
    %9 = vector.broadcast %8 : vector<16x1xf32> to vector<16x32xf32>
    %10 = arith.mulf %0, %9 : vector<16x32xf32>
    %c0_3 = arith.constant 0 : index
    %c0_4 = arith.constant 0 : index
    %11 = vector.load %arg2[%c0_3, %c0_4] : memref<1x32xf32, #tpu.memory_space<vmem>>, vector<1x32xf32>
    %12 = vector.broadcast %11 : vector<1x32xf32> to vector<16x32xf32>
    %13 = arith.mulf %12, %10 : vector<16x32xf32>
    %c0_5 = arith.constant 0 : index
    %c0_6 = arith.constant 0 : index
    %14 = vector.load %arg3[%c0_5, %c0_6] : memref<16x32xf32, #tpu.memory_space<vmem>>, vector<16x32xf32>
    tpu.vector_store %arg3[%c0_5, %c0_6], %13 {strides = array<i32>} : memref<16x32xf32, #tpu.memory_space<vmem>>, vector<16x32xf32>,
    return
  }
  func.func @transform_0(%arg0: i32) -> (i32, i32) {
    %c0_i32 = arith.constant 0 : i32
    %c0_i32_0 = arith.constant 0 : i32
    return %arg0, %c0_i32 : i32, i32
  }
  func.func @transform_1(%arg0: i32) -> (i32, i32) {
    %c0_i32 = arith.constant 0 : i32
    %c0_i32_0 = arith.constant 0 : i32
    %c0_i32_1 = arith.constant 0 : i32
    return %c0_i32, %c0_i32_0 : i32, i32
  }
  func.func @transform_2(%arg0: i32) -> (i32, i32) {
    %c0_i32 = arith.constant 0 : i32
    %c0_i32_0 = arith.constant 0 : i32
    return %arg0, %c0_i32 : i32, i32
  }
}

</mosaic_0001>

<llo_original>
// kernel: tpu_custom_call.1
$region0: #{tpu_custom_call.1}
  #allocation0 [shape = 'u32[]', space=smem, size = 0x4, offset = 0x4, fixed_abs, tag = 'smem constant byte address 0x4 - core index']
  #allocation1 [shape = 'u32[144,128]{1,0:T(1,128)}', space=vmem, size = 0x12000, scoped, tag = 'internal scratch']
  %s0 = inlined_call_operand.hbm [shape: f32[16,32], index: 0, kind: input, shape index: {}]
  %s1 = inlined_call_operand.vmem [shape: f32[1,32], index: 1, kind: input, shape index: {}]
  %s2 = inlined_call_operand.hbm [shape: f32[16,32], index: 2, kind: output, shape index: {}]
  %s3 = sld [smem:[#allocation0]]
  $region22: #{tpu_custom_call.1} parent=0
    _
  %s5 = ssub.s32 1, %s3
  %s6 = scalar_select 0, %s5, %s3
  $region1: #{tpu_custom_call.1} parent=0
    #allocation2 [shape = 'u8[8192]{0}', space=vmem, size = 0x2000, scoped, tag = 'input window, operand 0, single buffered']
    #allocation3 [shape = 's32[1]{0}', space=sflag, size = 0x4, scoped, tag = 'scoped memory for tpu_custom_call.1']
    #allocation4 [shape = 's32[1]{0}', space=sflag, size = 0x4, scoped, tag = 'scoped memory for tpu_custom_call.1']
    #allocation5 [shape = 'u8[8192]{0}', space=vmem, size = 0x2000, scoped, tag = 'output window, operand 0, single buffered']
    %7 = vsyncpa [#allocation3], 0
    %8 = vsyncpa [#allocation4], 0
    // Predicated region
    $region2: #{tpu_custom_call.1} parent=1 // pred_check
      _
    $region3: #{tpu_custom_call.1} parent=1 // pred_check_branch
      %10 = sbr.rel (0) target = $region5
    $region4: #{tpu_custom_call.1} parent=1 // pred_region
      %s12 = ssub.s32 256, 256
      %13 = vsyncadd [#allocation3], %s12
      %s14 = sshll.u32 [#allocation2], 4
      %s15 = int_to_ptr.vmem [resolvable:$true] %s14
      %20 = dma.hbm_to_vmem [thread:$0]  %s0, 256, %s15, [#allocation3], 128, 128, 8
    $region5: #{tpu_custom_call.1} parent=1 // pred_fallthru
      _
    // Predicated region
    $region6: #{tpu_custom_call.1} parent=1 // pred_check
      _
    $region7: #{tpu_custom_call.1} parent=1 // pred_check_branch
      %22 = sbr.rel (0) target = $region9
    $region8: #{tpu_custom_call.1} parent=1 // pred_region
      _
    $region9: #{tpu_custom_call.1} parent=1 // pred_fallthru
      _
    // Predicated region
    $region10: #{tpu_custom_call.1} parent=1 // pred_check
      _
    $region11: #{tpu_custom_call.1} parent=1 // pred_check_branch
      %24 = sbr.rel (0) target = $region13
    $region12: #{tpu_custom_call.1} parent=1 // pred_region
      %25 = dma.done [#allocation3], 256
    $region13: #{tpu_custom_call.1} parent=1 // pred_fallthru
      _
    %v26 = vld [vmem:[#allocation2] sm:$0xff]
    %v27 = vld [vmem:[#allocation2 + $0x8] sm:$0xff]
    %v28 = vmul.f32 %v26, %v26
    %v29 = vmul.f32 %v27, %v27
    %vm30 = vcmask 261120
    %v31 = vsel %vm30, %v28, 0.0
    %32 = vadd.xlane.f32.xlu0 %v31
    %v33 = vpop.xlane.xlu0 %32
    %v34 = vsel %vm30, %v29, 0.0
    %35 = vadd.xlane.f32.xlu0 %v34
    %v36 = vpop.xlane.xlu0 %35
    %v37 = vmul.f32 %v33, 0.03125
    %v38 = vmul.f32 %v36, 0.03125
    %v39 = vadd.f32 %v37, 1e-06
    %v40 = vadd.f32 %v38, 1e-06
    %v41 = vrsqrt.pop %v39
    %v42 = vrsqrt.pop %v40
    %v43 = vmul.f32 %v26, %v41
    %v44 = vmul.f32 %v27, %v42
    %v45 = vld [vmem:[%s1] sm:$0x1]
    %v47 = vlaneseq
    %v48 = vshrl.u32 %v47, 7
    %v49 = vsub.s32 0, %v48
    %v50 = vrot.slane %v45, %v49
    %v52 = vmul.f32 %v50, %v43
    %v53 = vmul.f32 %v50, %v44
    %54 = vst.msk [vmem:[#allocation5] sm:$0xff] %vm30, %v52
    %55 = vst.msk [vmem:[#allocation5 + $0x8] sm:$0xff] %vm30, %v53
    // Predicated region
    $region14: #{tpu_custom_call.1} parent=1 // pred_check
      _
    $region15: #{tpu_custom_call.1} parent=1 // pred_check_branch
      %57 = sbr.rel (0) target = $region17
    $region16: #{tpu_custom_call.1} parent=1 // pred_region
      %s59 = ssub.s32 256, 256
      %60 = vsyncadd [#allocation4], %s59
      %s61 = sshll.u32 [#allocation5], 4
      %s62 = int_to_ptr.vmem [resolvable:$true] %s61
      %67 = dma.vmem_to_hbm [thread:$0]  %s62, 256, %s2, [#allocation4], 128, 128, 8
    $region17: #{tpu_custom_call.1} parent=1 // pred_fallthru
      _
    // Predicated region
    $region18: #{tpu_custom_call.1} parent=1 // pred_check
      _
    $region19: #{tpu_custom_call.1} parent=1 // pred_check_branch
      %69 = sbr.rel (0) target = $region21
    $region20: #{tpu_custom_call.1} parent=1 // pred_region
      %70 = dma.done [#allocation4], 256
    $region21: #{tpu_custom_call.1} parent=1 // pred_fallthru
      _
    %71 = vsyncpa [#allocation3], 1
    %72 = vsyncpa [#allocation4], 1

</llo_original>
